<compile_context>
chip_gen: v5e
topology: v5e:2x2
jax: 0.10.0
libtpu: 0.0.40
codegen_flags: <defaults>
</compile_context>

<pallas_src>
import functools

import jax
import jax.numpy as jnp
from jax import lax
from jax.experimental import pallas as pl
from jax.experimental.pallas import tpu as pltpu

TM_CAP = 512    # rows of the im2col matrix per tile
TN_CAP = 512    # output channels per tile
TK_CAP = 2048   # reduction (kh*kw*cin) per tile


def _round_up(x, m):
    return (x + m - 1) // m * m


def _pick_tile(dim, cap):
    """Multiple-of-128 tile <= cap.  If round_up(dim,128) fits under cap use
    it (single step, zero extra pad); otherwise pick the tile minimizing
    zero-padding of `dim` (ties -> largest tile)."""
    dp = _round_up(dim, 128)
    if dp <= cap:
        return dp
    best_t, best_pad = None, None
    for t in range(cap, 0, -128):
        pad = _round_up(dim, t) - dim
        if best_pad is None or pad < best_pad:
            best_t, best_pad = t, pad
    return best_t


# ----------------------------------------------------------------------------
# Pallas kernels
# ----------------------------------------------------------------------------
def _matmul_bias_kernel(x_ref, w_ref, b_ref, o_ref, *, relu):
    """O = X @ W + b (optional ReLU).  bf16 operands, f32 accumulation done
    directly in the resident output block (same (i,j) block across k)."""
    k = pl.program_id(2)

    @pl.when(k == 0)
    def _():
        o_ref[...] = jnp.broadcast_to(b_ref[...], o_ref.shape)

    o_ref[...] += jnp.dot(x_ref[...], w_ref[...],
                          preferred_element_type=jnp.float32)

    if relu:
        @pl.when(k == pl.num_programs(2) - 1)
        def _():
            o_ref[...] = jnp.maximum(o_ref[...], 0.0)


def matmul_bias(x, layer, *, relu):
    """x:(M,K) bf16-castable, layer: packed conv params (pre-padded bf16 W,
    f32 bias).  Returns (M, N) f32."""
    M, K = x.shape
    assert K == layer['K'], (K, layer['K'])
    Kp, Np, TK, TN = layer['Kp'], layer['Np'], layer['TK'], layer['TN']
    TM = min(TM_CAP, _round_up(M, 128))
    Mp = _round_up(M, TM)
    xp = jnp.pad(x.astype(jnp.bfloat16), ((0, Mp - M), (0, Kp - K)))

    out = pl.pallas_call(
        functools.partial(_matmul_bias_kernel, relu=relu),
        out_shape=jax.ShapeDtypeStruct((Mp, Np), jnp.float32),
        grid_spec=pltpu.PrefetchScalarGridSpec(
            num_scalar_prefetch=0,
            grid=(Mp // TM, Np // TN, Kp // TK),
            in_specs=[
                pl.BlockSpec((TM, TK), lambda i, j, k: (i, k)),
                pl.BlockSpec((TK, TN), lambda i, j, k: (k, j)),
                pl.BlockSpec((1, TN), lambda i, j, k: (0, j)),
            ],
            out_specs=pl.BlockSpec((TM, TN), lambda i, j, k: (i, j)),
        ),
        compiler_params=pltpu.CompilerParams(
            dimension_semantics=("parallel", "parallel", "arbitrary")),
    )(xp, layer['w'], layer['b'])
    return out[:M, :layer['N']]


def _l2norm_kernel(x_ref, w_ref, o_ref):
    x = x_ref[...]
    ssq = jnp.sum(x * x, axis=-1, keepdims=True)
    inv = lax.rsqrt(ssq + 1e-20)           # ~ 1 / (sqrt(ssq) + 1e-10)
    o_ref[...] = x * inv * w_ref[...]


def l2norm(x_nhwc, weight):
    """L2Norm over the channel dim (last in NHWC), scaled by `weight` (1,C)."""
    N, H, W, C = x_nhwc.shape
    M = N * H * W
    xf = x_nhwc.reshape(M, C).astype(jnp.float32)
    TMl = 256
    Mp = _round_up(M, TMl)
    xp = jnp.pad(xf, ((0, Mp - M), (0, 0)))
    out = pl.pallas_call(
        _l2norm_kernel,
        out_shape=jax.ShapeDtypeStruct((Mp, C), jnp.float32),
        grid=(Mp // TMl,),
        in_specs=[
            pl.BlockSpec((TMl, C), lambda i: (i, 0)),
            pl.BlockSpec((1, C), lambda i: (0, 0)),
        ],
        out_specs=pl.BlockSpec((TMl, C), lambda i: (i, 0)),
        compiler_params=pltpu.CompilerParams(dimension_semantics=("parallel",)),
    )(xp, weight)
    return out[:M].reshape(N, H, W, C)


# ----------------------------------------------------------------------------
# Conv / pool wrappers (glue: bf16 im2col + Pallas matmul)
# ----------------------------------------------------------------------------
def conv2d(x, layer, *, stride=1, padding=0, dilation=1, relu=False):
    """x: NHWC; layer: packed conv params.  Returns NHWC f32."""
    n, H, W, cin = x.shape
    kh, kw = layer['kh'], layer['kw']
    assert cin == layer['cin'], (cin, layer['cin'])
    x = x.astype(jnp.bfloat16)
    if padding:
        x = jnp.pad(x, ((0, 0), (padding, padding), (padding, padding), (0, 0)))
    Hp, Wp = H + 2 * padding, W + 2 * padding
    Hout = (Hp - (dilation * (kh - 1) + 1)) // stride + 1
    Wout = (Wp - (dilation * (kw - 1) + 1)) // stride + 1
    if kh == 1 and kw == 1 and stride == 1:
        X = x.reshape(n * Hout * Wout, cin)
    else:
        patches = []
        for i in range(kh):
            for j in range(kw):
                patches.append(
                    x[:, i * dilation: i * dilation + (Hout - 1) * stride + 1: stride,
                         j * dilation: j * dilation + (Wout - 1) * stride + 1: stride, :])
        X = jnp.concatenate(patches, axis=-1).reshape(
            n * Hout * Wout, kh * kw * cin)
    Y = matmul_bias(X, layer, relu=relu)
    return Y.reshape(n, Hout, Wout, layer['N'])


def maxpool2x2(x):
    # kernel=2, stride=2, floor mode (torchvision VGG default)
    N, H, W, C = x.shape
    H2, W2 = H // 2, W // 2
    x = x[:, :H2 * 2, :W2 * 2, :]
    return x.reshape(N, H2, 2, W2, 2, C).max(axis=(2, 4))


def maxpool3x3_s1_p1(x):
    N, H, W, C = x.shape
    xp = jnp.pad(x, ((0, 0), (1, 1), (1, 1), (0, 0)),
                 constant_values=-jnp.inf)
    out = None
    for i in range(3):
        for j in range(3):
            sl = xp[:, i:i + H, j:j + W, :]
            out = sl if out is None else jnp.maximum(out, sl)
    return out


# ----------------------------------------------------------------------------
# Parameter construction (deterministic, synthetic, pre-packed for Pallas)
# ----------------------------------------------------------------------------
def _pack_conv(w, b):
    """Reshape conv weight (kh,kw,cin,cout) to (K,N), cast to bf16 and pre-pad
    to the Pallas tile grid; bias pre-padded in f32."""
    kh, kw, cin, cout = w.shape
    K, N = kh * kw * cin, cout
    TK = _pick_tile(K, TK_CAP)
    TN = _pick_tile(N, TN_CAP)
    Kp, Np = _round_up(K, TK), _round_up(N, TN)
    w2 = jnp.pad(w.reshape(K, N).astype(jnp.bfloat16),
                 ((0, Kp - K), (0, Np - N)))
    b2 = jnp.pad(b.reshape(1, N).astype(jnp.float32), ((0, 0), (0, Np - N)))
    return dict(w=w2, b=b2, K=K, N=N, Kp=Kp, Np=Np, TK=TK, TN=TN,
                kh=kh, kw=kw, cin=cin, cout=cout)


def make_params(num_classes, seed=0):
    key = jax.random.PRNGKey(seed)
    counter = [0]

    def new_conv(kh, kw, cin, cout):
        counter[0] += 1
        k1, k2 = jax.random.split(jax.random.fold_in(key, counter[0]))
        fan_in = kh * kw * cin
        w = jax.random.normal(k1, (kh, kw, cin, cout), jnp.float32) / jnp.sqrt(fan_in)
        b = 0.01 * jax.random.normal(k2, (cout,), jnp.float32)
        return w, b

    params = {}
    # VGG16 features up to index 22 (conv4_3 + ReLU): 10 convs, all 3x3 pad 1.
    vgg_cfg = [(3, 64), (64, 64), (64, 128), (128, 128), (128, 256),
               (256, 256), (256, 256), (256, 512), (512, 512), (512, 512)]
    params['vgg'] = [_pack_conv(*new_conv(3, 3, ci, co)) for ci, co in vgg_cfg]

    params['l2norm_w'] = jnp.full((1, 512), 20.0, jnp.float32)

    # VGG_FT_HEAD convs
    params['ft_conv1'] = _pack_conv(*new_conv(3, 3, 512, 1024))   # pad 6, dil 6
    params['ft_conv2'] = _pack_conv(*new_conv(1, 1, 1024, 1024))

    # extras: (cin, cout, k, stride, pad)
    extra_cfg = [(1024, 256, 1, 1, 0), (256, 512, 3, 2, 1),
                 (512, 128, 1, 1, 0), (128, 256, 3, 2, 1),
                 (256, 128, 1, 1, 0), (128, 256, 3, 1, 0),
                 (256, 128, 1, 1, 0), (128, 256, 3, 1, 0)]
    params['extra_cfg'] = extra_cfg
    params['extra'] = [_pack_conv(*new_conv(k, k, ci, co))
                       for (ci, co, k, _, _) in extra_cfg]

    # loc/conf heads fused per source along the output-channel axis.
    mbox = [4, 6, 6, 6, 4, 4]
    src_ch = [512, 1024, 512, 256, 256, 256]
    heads = []
    for c, m in zip(src_ch, mbox):
        lw, lb = new_conv(3, 3, c, m * 4)
        cw, cb = new_conv(3, 3, c, m * num_classes)
        fused_w = jnp.concatenate([lw, cw], axis=-1)
        fused_b = jnp.concatenate([lb, cb], axis=0)
        heads.append(dict(layer=_pack_conv(fused_w, fused_b),
                          n_loc=m * 4, n_conf=m * num_classes))
    params['heads'] = heads
    return params


# ----------------------------------------------------------------------------
# SSD_VGG_300 forward
# ----------------------------------------------------------------------------
def ssd_vgg_300_forward(x_nchw, params, num_classes):
    # Input NCHW -> NHWC internally; outputs match PyTorch exactly:
    # loc (N, num_priors, 4), conf (N, num_priors, num_classes).
    x = jnp.transpose(x_nchw, (0, 2, 3, 1)).astype(jnp.float32)

    vgg = params['vgg']
    # block 1
    x = conv2d(x, vgg[0], padding=1, relu=True)
    x = conv2d(x, vgg[1], padding=1, relu=True)
    x = maxpool2x2(x)
    # block 2
    x = conv2d(x, vgg[2], padding=1, relu=True)
    x = conv2d(x, vgg[3], padding=1, relu=True)
    x = maxpool2x2(x)
    # block 3
    x = conv2d(x, vgg[4], padding=1, relu=True)
    x = conv2d(x, vgg[5], padding=1, relu=True)
    x = conv2d(x, vgg[6], padding=1, relu=True)
    x = maxpool2x2(x)
    # block 4 (conv4_3 + ReLU)
    x = conv2d(x, vgg[7], padding=1, relu=True)
    x = conv2d(x, vgg[8], padding=1, relu=True)
    x = conv2d(x, vgg[9], padding=1, relu=True)

    sources = [l2norm(x, params['l2norm_w'])]

    # ---- VGG_FT_HEAD (intended behavior; reference's self.layers bug fixed) ----
    x = maxpool3x3_s1_p1(x)
    x = conv2d(x, params['ft_conv1'], padding=6, dilation=6, relu=True)
    x = conv2d(x, params['ft_conv2'], relu=True)
    sources.append(x)

    # ---- extra layers: ReLU after every conv, collect after odd indices ----
    for k, (layer, (ci, co, ks, st, pad)) in enumerate(
            zip(params['extra'], params['extra_cfg'])):
        x = conv2d(x, layer, stride=st, padding=pad, relu=True)
        if k % 2 == 1:
            sources.append(x)

    assert len(sources) == 6

    # ---- fused loc/conf heads (3x3 pad 1, no activation) ----
    loc_flat, conf_flat = [], []
    for s, head in zip(sources, params['heads']):
        y = conv2d(s, head['layer'], padding=1, relu=False)   # NHWC output
        l = y[..., :head['n_loc']]
        c = y[..., head['n_loc']:]
        loc_flat.append(l.reshape(l.shape[0], -1))
        conf_flat.append(c.reshape(c.shape[0], -1))

    loc = jnp.concatenate(loc_flat, axis=1)
    conf = jnp.concatenate(conf_flat, axis=1)
    return (loc.reshape(loc.shape[0], -1, 4),
            conf.reshape(conf.shape[0], -1, num_classes))


# ----------------------------------------------------------------------------
if __name__ == "__main__":
    num_classes = 4

    # Quick numerical sanity check of the Pallas matmul kernel (bf16 operands,
    # f32 accumulation) against a plain-JAX reference.
    kx, kw_, kb = jax.random.split(jax.random.PRNGKey(1), 3)
    wt = jax.random.normal(kw_, (1, 1, 300, 96), jnp.float32) / jnp.sqrt(300.0)
    bt = 0.01 * jax.random.normal(kb, (96,), jnp.float32)
    layer_t = _pack_conv(wt, bt)
    xt = jax.random.normal(kx, (200, 300), jnp.float32)
    got = matmul_bias(xt, layer_t, relu=True)
    ref = jnp.maximum(
        jnp.dot(xt.astype(jnp.bfloat16).astype(jnp.float32),
                wt.reshape(300, 96).astype(jnp.bfloat16).astype(jnp.float32)) + bt,
        0.0)
    assert jnp.allclose(got, ref, rtol=2e-2, atol=2e-2), \
        float(jnp.max(jnp.abs(got - ref)))

    # Smallest input for which all extra (valid 3x3) layers stay >= 1x1:
    # 136 -> conv4_3 17x17 -> source spatial sizes [17,17,9,5,3,1].
    N, C, H, W = 1, 3, 136, 136
    x = jax.random.normal(jax.random.PRNGKey(0), (N, C, H, W), jnp.float32)

    params = make_params(num_classes, seed=0)
    loc, conf = ssd_vgg_300_forward(x, params, num_classes)
    loc, conf = jax.block_until_ready((loc, conf))

    # priors = 17^2*4 + 17^2*6 + 9^2*6 + 5^2*6 + 3^2*4 + 1^2*4 = 3566
    assert loc.shape == (N, 3566, 4), loc.shape
    assert conf.shape == (N, 3566, num_classes), conf.shape
    assert jnp.all(jnp.isfinite(loc)) and jnp.all(jnp.isfinite(conf))
    print("KERNEL_OK")
</pallas_src>

<mosaic_0001>
module attributes {stable_mosaic.version = 11 : i64} {
  func.func @_matmul_bias_kernel(%arg0: i32, %arg1: i32, %arg2: i32, %arg3: memref<256x384xbf16, #tpu.memory_space<vmem>>, %arg4: memref<384x128xbf16, #tpu.memory_space<vmem>>, %arg5: memref<1x128xf32, #tpu.memory_space<vmem>>, %arg6: memref<256x128xf32, #tpu.memory_space<vmem>>) attributes {dimension_semantics = [#tpu.dimension_semantics<parallel>, #tpu.dimension_semantics<parallel>, #tpu.dimension_semantics<arbitrary>], iteration_bounds = array<i64: 1, 1, 1>, scalar_prefetch = 0 : i64, scratch_operands = 0 : i64, tpu.core_type = #tpu.core_type<tc>, window_params = [{transform_indices = @transform_0, window_bounds = array<i64: 256, 384>}, {transform_indices = @transform_1, window_bounds = array<i64: 384, 128>}, {transform_indices = @transform_2, window_bounds = array<i64: 1, 128>}, {transform_indices = @transform_3, window_bounds = array<i64: 256, 128>}]} {
    %c0_i32 = arith.constant 0 : i32
    %0 = arith.cmpi eq, %arg2, %c0_i32 : i32
    %1 = arith.extui %0 : i1 to i32
    %c0_i32_0 = arith.constant 0 : i32
    %2 = arith.cmpi ne, %1, %c0_i32_0 : i32
    scf.if %2 {
      %c0_10 = arith.constant 0 : index
      %c0_11 = arith.constant 0 : index
      %12 = vector.load %arg5[%c0_10, %c0_11] : memref<1x128xf32, #tpu.memory_space<vmem>>, vector<1x128xf32>
      %13 = vector.shape_cast %12 : vector<1x128xf32> to vector<1x128xf32>
      %14 = vector.broadcast %13 : vector<1x128xf32> to vector<256x128xf32>
      %c0_12 = arith.constant 0 : index
      %c0_13 = arith.constant 0 : index
      %15 = vector.load %arg6[%c0_12, %c0_13] : memref<256x128xf32, #tpu.memory_space<vmem>>, vector<256x128xf32>
      tpu.vector_store %arg6[%c0_12, %c0_13], %14 {strides = array<i32>} : memref<256x128xf32, #tpu.memory_space<vmem>>, vector<256x128xf32>,
    } else {
    }
    %c0 = arith.constant 0 : index
    %c0_1 = arith.constant 0 : index
    %3 = vector.load %arg6[%c0, %c0_1] : memref<256x128xf32, #tpu.memory_space<vmem>>, vector<256x128xf32>
    %c0_2 = arith.constant 0 : index
    %c0_3 = arith.constant 0 : index
    %4 = vector.load %arg3[%c0_2, %c0_3] : memref<256x384xbf16, #tpu.memory_space<vmem>>, vector<256x384xbf16>
    %c0_4 = arith.constant 0 : index
    %c0_5 = arith.constant 0 : index
    %5 = vector.load %arg4[%c0_4, %c0_5] : memref<384x128xbf16, #tpu.memory_space<vmem>>, vector<384x128xbf16>
    %cst = arith.constant dense<0.000000e+00> : vector<256x128xf32>
    %6 = tpu.matmul %4, %5, %cst {dimension_numbers = #tpu.dot_dimension_numbers<[1], [0], [0], [1], [0, 0, 1, 1], [], []>} : vector<256x384xbf16>, vector<384x128xbf16>, vector<256x128xf32> -> vector<256x128xf32>
    %7 = arith.addf %3, %6 : vector<256x128xf32>
    %c0_6 = arith.constant 0 : index
    %c0_7 = arith.constant 0 : index
    %8 = vector.load %arg6[%c0_6, %c0_7] : memref<256x128xf32, #tpu.memory_space<vmem>>, vector<256x128xf32>
    tpu.vector_store %arg6[%c0_6, %c0_7], %7 {strides = array<i32>} : memref<256x128xf32, #tpu.memory_space<vmem>>, vector<256x128xf32>,
    %c0_i32_8 = arith.constant 0 : i32
    %9 = arith.cmpi eq, %arg2, %c0_i32_8 : i32
    %10 = arith.extui %9 : i1 to i32
    %c0_i32_9 = arith.constant 0 : i32
    %11 = arith.cmpi ne, %10, %c0_i32_9 : i32
    scf.if %11 {
      %c0_10 = arith.constant 0 : index
      %c0_11 = arith.constant 0 : index
      %12 = vector.load %arg6[%c0_10, %c0_11] : memref<256x128xf32, #tpu.memory_space<vmem>>, vector<256x128xf32>
      %cst_12 = arith.constant 0.000000e+00 : f32
      %13 = vector.broadcast %cst_12 : f32 to vector<256x128xf32>
      %14 = arith.maximumf %12, %13 : vector<256x128xf32>
      %c0_13 = arith.constant 0 : index
      %c0_14 = arith.constant 0 : index
      %15 = vector.load %arg6[%c0_13, %c0_14] : memref<256x128xf32, #tpu.memory_space<vmem>>, vector<256x128xf32>
      tpu.vector_store %arg6[%c0_13, %c0_14], %14 {strides = array<i32>} : memref<256x128xf32, #tpu.memory_space<vmem>>, vector<256x128xf32>,
    } else {
    }
    return
  }
  func.func @transform_0(%arg0: i32, %arg1: i32, %arg2: i32) -> (i32, i32) {
    %c0_i32 = arith.constant 0 : i32
    return %arg0, %arg2 : i32, i32
  }
  func.func @transform_1(%arg0: i32, %arg1: i32, %arg2: i32) -> (i32, i32) {
    %c0_i32 = arith.constant 0 : i32
    return %arg2, %arg1 : i32, i32
  }
  func.func @transform_2(%arg0: i32, %arg1: i32, %arg2: i32) -> (i32, i32) {
    %c0_i32 = arith.constant 0 : i32
    %c0_i32_0 = arith.constant 0 : i32
    return %c0_i32, %arg1 : i32, i32
  }
  func.func @transform_3(%arg0: i32, %arg1: i32, %arg2: i32) -> (i32, i32) {
    %c0_i32 = arith.constant 0 : i32
    return %arg0, %arg1 : i32, i32
  }
}

</mosaic_0001>

<llo_original>
// kernel: tpu_custom_call.1
$region0: #{tpu_custom_call.1}
  #allocation0 [shape = 'u32[]', space=smem, size = 0x4, offset = 0x4, fixed_abs, tag = 'smem constant byte address 0x4 - core index']
  #allocation1 [shape = 'u32[72,128]{1,0:T(1,128)}', space=vmem, size = 0x9000, scoped, tag = 'internal scratch']
  %s0 = inlined_call_operand.hbm [shape: bf16[256,384], index: 0, kind: input, shape index: {}]
  %s1 = inlined_call_operand.hbm [shape: bf16[384,128], index: 1, kind: input, shape index: {}]
  %s2 = inlined_call_operand.vmem [shape: f32[1,128], index: 2, kind: input, shape index: {}]
  %s3 = inlined_call_operand.hbm [shape: f32[256,128], index: 3, kind: output, shape index: {}]
  %s4 = sld [smem:[#allocation0]]
  $region38: #{tpu_custom_call.1} parent=0
    _
  %s6 = ssub.s32 1, %s4
  %s7 = scalar_select 0, %s6, %s4
  $region1: #{tpu_custom_call.1} parent=0
    #allocation2 [shape = 'u8[196608]{0}', space=vmem, size = 0x30000, scoped, tag = 'input window, operand 0, single buffered']
    #allocation3 [shape = 's32[1]{0}', space=sflag, size = 0x4, scoped, tag = 'scoped memory for tpu_custom_call.1']
    #allocation4 [shape = 's32[1]{0}', space=sflag, size = 0x4, scoped, tag = 'scoped memory for tpu_custom_call.1']
    #allocation5 [shape = 'u8[98304]{0}', space=vmem, size = 0x18000, scoped, tag = 'input window, operand 1, single buffered']
    #allocation6 [shape = 's32[1]{0}', space=sflag, size = 0x4, scoped, tag = 'scoped memory for tpu_custom_call.1']
    #allocation7 [shape = 'u8[131072]{0}', space=vmem, size = 0x20000, scoped, tag = 'output window, operand 0, single buffered']
    %8 = vsyncpa [#allocation3], 0
    %9 = vsyncpa [#allocation6], 0
    %10 = vsyncpa [#allocation4], 0
    // Predicated region
    $region2: #{tpu_custom_call.1} parent=1 // pred_check
      _
    $region3: #{tpu_custom_call.1} parent=1 // pred_check_branch
      %12 = sbr.rel (0) target = $region5
    $region4: #{tpu_custom_call.1} parent=1 // pred_region
      %14 = vsyncadd [#allocation3], 0
      %s15 = sshll.u32 %s0, 4
      %s16 = int_to_ptr.hbm [resolvable:$true] %s15
      %s17 = sshll.u32 [#allocation2], 4
      %s18 = int_to_ptr.vmem [resolvable:$true] %s17
      %23 = dma.hbm_to_vmem [thread:$0]  %s16, 6144, %s18, [#allocation3], 192, 192, 12
    $region5: #{tpu_custom_call.1} parent=1 // pred_fallthru
      _
    // Predicated region
    $region6: #{tpu_custom_call.1} parent=1 // pred_check
      _
    $region7: #{tpu_custom_call.1} parent=1 // pred_check_branch
      %25 = sbr.rel (0) target = $region9
    $region8: #{tpu_custom_call.1} parent=1 // pred_region
      %27 = vsyncadd [#allocation6], 0
      %s28 = sshll.u32 %s1, 4
      %s29 = int_to_ptr.hbm [resolvable:$true] %s28
      %s30 = sshll.u32 [#allocation5], 4
      %s31 = int_to_ptr.vmem [resolvable:$true] %s30
      %36 = dma.hbm_to_vmem [thread:$0]  %s29, 3072, %s31, [#allocation6], 64, 64, 4
    $region9: #{tpu_custom_call.1} parent=1 // pred_fallthru
      _
    // Predicated region
    $region10: #{tpu_custom_call.1} parent=1 // pred_check
      _
    $region11: #{tpu_custom_call.1} parent=1 // pred_check_branch
      %38 = sbr.rel (0) target = $region13
    $region12: #{tpu_custom_call.1} parent=1 // pred_region
      _
    $region13: #{tpu_custom_call.1} parent=1 // pred_fallthru
      _
    // Predicated region
    $region14: #{tpu_custom_call.1} parent=1 // pred_check
      _
    $region15: #{tpu_custom_call.1} parent=1 // pred_check_branch
      %40 = sbr.rel (0) target = $region17
    $region16: #{tpu_custom_call.1} parent=1 // pred_region
      %42 = dma.done [#allocation3], 6144
    $region17: #{tpu_custom_call.1} parent=1 // pred_fallthru
      _
    // Predicated region
    $region18: #{tpu_custom_call.1} parent=1 // pred_check
      _
    $region19: #{tpu_custom_call.1} parent=1 // pred_check_branch
      %44 = sbr.rel (0) target = $region21
    $region20: #{tpu_custom_call.1} parent=1 // pred_region
      %46 = dma.done [#allocation6], 3072
    $region21: #{tpu_custom_call.1} parent=1 // pred_fallthru
      _
    %p47 = scmp.eq.s32.totalorder 0, 0
    // Predicated region
    $region22: #{tpu_custom_call.1} parent=1 // pred_check
      %p48 = pneg %p47
    $region23: #{tpu_custom_call.1} parent=1 // pred_check_branch
      %50 = sbr.rel (%p48) target = $region25
    $region24: #{tpu_custom_call.1} parent=1 // pred_region
      %v51 = vld [vmem:[%s2] sm:$0x1]
      %v53 = vperm.slane %v51, 0
      %55 = vst [vmem:[#allocation7] sm:$0xff] %v53
      %56 = vst [vmem:[#allocation7 + $0x8] sm:$0xff] %v53
      %57 = vst [vmem:[#allocation7 + $0x10] sm:$0xff] %v53
      %58 = vst [vmem:[#allocation7 + $0x18] sm:$0xff] %v53
      %59 = vst [vmem:[#allocation7 + $0x20] sm:$0xff] %v53
      %60 = vst [vmem:[#allocation7 + $0x28] sm:$0xff] %v53
      %61 = vst [vmem:[#allocation7 + $0x30] sm:$0xff] %v53
      %62 = vst [vmem:[#allocation7 + $0x38] sm:$0xff] %v53
      %63 = vst [vmem:[#allocation7 + $0x40] sm:$0xff] %v53
      %64 = vst [vmem:[#allocation7 + $0x48] sm:$0xff] %v53
      %65 = vst [vmem:[#allocation7 + $0x50] sm:$0xff] %v53
      %66 = vst [vmem:[#allocation7 + $0x58] sm:$0xff] %v53
      %67 = vst [vmem:[#allocation7 + $0x60] sm:$0xff] %v53
      %68 = vst [vmem:[#allocation7 + $0x68] sm:$0xff] %v53
      %69 = vst [vmem:[#allocation7 + $0x70] sm:$0xff] %v53
      %70 = vst [vmem:[#allocation7 + $0x78] sm:$0xff] %v53
      %71 = vst [vmem:[#allocation7 + $0x80] sm:$0xff] %v53
      %72 = vst [vmem:[#allocation7 + $0x88] sm:$0xff] %v53
      %73 = vst [vmem:[#allocation7 + $0x90] sm:$0xff] %v53
      %74 = vst [vmem:[#allocation7 + $0x98] sm:$0xff] %v53
      %75 = vst [vmem:[#allocation7 + $0xa0] sm:$0xff] %v53
      %76 = vst [vmem:[#allocation7 + $0xa8] sm:$0xff] %v53
      %77 = vst [vmem:[#allocation7 + $0xb0] sm:$0xff] %v53
      %78 = vst [vmem:[#allocation7 + $0xb8] sm:$0xff] %v53
      %79 = vst [vmem:[#allocation7 + $0xc0] sm:$0xff] %v53
      %80 = vst [vmem:[#allocation7 + $0xc8] sm:$0xff] %v53
      %81 = vst [vmem:[#allocation7 + $0xd0] sm:$0xff] %v53
      %82 = vst [vmem:[#allocation7 + $0xd8] sm:$0xff] %v53
      %83 = vst [vmem:[#allocation7 + $0xe0] sm:$0xff] %v53
      %84 = vst [vmem:[#allocation7 + $0xe8] sm:$0xff] %v53
      %85 = vst [vmem:[#allocation7 + $0xf0] sm:$0xff] %v53
      %86 = vst [vmem:[#allocation7 + $0xf8] sm:$0xff] %v53
    $region25: #{tpu_custom_call.1} parent=1 // pred_fallthru
      _
    %v87 = vld [vmem:[#allocation7] sm:$0xff]
    %v88 = vld [vmem:[#allocation7 + $0x8] sm:$0xff]
    %v89 = vld [vmem:[#allocation7 + $0x10] sm:$0xff]
    %v90 = vld [vmem:[#allocation7 + $0x18] sm:$0xff]
    %v91 = vld [vmem:[#allocation7 + $0x20] sm:$0xff]
    %v92 = vld [vmem:[#allocation7 + $0x28] sm:$0xff]
    %v93 = vld [vmem:[#allocation7 + $0x30] sm:$0xff]
    %v94 = vld [vmem:[#allocation7 + $0x38] sm:$0xff]
    %v95 = vld [vmem:[#allocation7 + $0x40] sm:$0xff]
    %v96 = vld [vmem:[#allocation7 + $0x48] sm:$0xff]
    %v97 = vld [vmem:[#allocation7 + $0x50] sm:$0xff]
    %v98 = vld [vmem:[#allocation7 + $0x58] sm:$0xff]
    %v99 = vld [vmem:[#allocation7 + $0x60] sm:$0xff]
    %v100 = vld [vmem:[#allocation7 + $0x68] sm:$0xff]
    %v101 = vld [vmem:[#allocation7 + $0x70] sm:$0xff]
    %v102 = vld [vmem:[#allocation7 + $0x78] sm:$0xff]
    %v103 = vld [vmem:[#allocation7 + $0x80] sm:$0xff]
    %v104 = vld [vmem:[#allocation7 + $0x88] sm:$0xff]
    %v105 = vld [vmem:[#allocation7 + $0x90] sm:$0xff]
    %v106 = vld [vmem:[#allocation7 + $0x98] sm:$0xff]
    %v107 = vld [vmem:[#allocation7 + $0xa0] sm:$0xff]
    %v108 = vld [vmem:[#allocation7 + $0xa8] sm:$0xff]
    %v109 = vld [vmem:[#allocation7 + $0xb0] sm:$0xff]
    %v110 = vld [vmem:[#allocation7 + $0xb8] sm:$0xff]
    %v111 = vld [vmem:[#allocation7 + $0xc0] sm:$0xff]
    %v112 = vld [vmem:[#allocation7 + $0xc8] sm:$0xff]
    %v113 = vld [vmem:[#allocation7 + $0xd0] sm:$0xff]
    %v114 = vld [vmem:[#allocation7 + $0xd8] sm:$0xff]
    %v115 = vld [vmem:[#allocation7 + $0xe0] sm:$0xff]
    %v116 = vld [vmem:[#allocation7 + $0xe8] sm:$0xff]
    %v117 = vld [vmem:[#allocation7 + $0xf0] sm:$0xff]
    %v118 = vld [vmem:[#allocation7 + $0xf8] sm:$0xff]
    %v119 = vld [vmem:[#allocation2] sm:$0xff]
    %v120 = vld [vmem:[#allocation2 + $0x8] sm:$0xf]
    %v121 = vld [vmem:[#allocation2 + $0xc] sm:$0xff]
    %v122 = vld [vmem:[#allocation2 + $0x14] sm:$0xf]
    %v123 = vld [vmem:[#allocation2 + $0x18] sm:$0xff]
    %v124 = vld [vmem:[#allocation2 + $0x20] sm:$0xf]
    %v125 = vld [vmem:[#allocation2 + $0x24] sm:$0xff]
    %v126 = vld [vmem:[#allocation2 + $0x2c] sm:$0xf]
    %v127 = vld [vmem:[#allocation2 + $0x30] sm:$0xff]
    %v128 = vld [vmem:[#allocation2 + $0x38] sm:$0xf]
    %v129 = vld [vmem:[#allocation2 + $0x3c] sm:$0xff]
    %v130 = vld [vmem:[#allocation2 + $0x44] sm:$0xf]
    %v131 = vld [vmem:[#allocation2 + $0x48] sm:$0xff]
    %v132 = vld [vmem:[#allocation2 + $0x50] sm:$0xf]
    %v133 = vld [vmem:[#allocation2 + $0x54] sm:$0xff]
    %v134 = vld [vmem:[#allocation2 + $0x5c] sm:$0xf]
    %v135 = vld [vmem:[#allocation2 + $0x60] sm:$0xff]
    %v136 = vld [vmem:[#allocation2 + $0x68] sm:$0xf]
    %v137 = vld [vmem:[#allocation2 + $0x6c] sm:$0xff]
    %v138 = vld [vmem:[#allocation2 + $0x74] sm:$0xf]
    %v139 = vld [vmem:[#allocation2 + $0x78] sm:$0xff]
    %v140 = vld [vmem:[#allocation2 + $0x80] sm:$0xf]
    %v141 = vld [vmem:[#allocation2 + $0x84] sm:$0xff]
    %v142 = vld [vmem:[#allocation2 + $0x8c] sm:$0xf]
    %v143 = vld [vmem:[#allocation2 + $0x90] sm:$0xff]
    %v144 = vld [vmem:[#allocation2 + $0x98] sm:$0xf]
    %v145 = vld [vmem:[#allocation2 + $0x9c] sm:$0xff]
    %v146 = vld [vmem:[#allocation2 + $0xa4] sm:$0xf]
    %v147 = vld [vmem:[#allocation2 + $0xa8] sm:$0xff]
    %v148 = vld [vmem:[#allocation2 + $0xb0] sm:$0xf]
    %v149 = vld [vmem:[#allocation2 + $0xb4] sm:$0xff]
    %v150 = vld [vmem:[#allocation2 + $0xbc] sm:$0xf]
    %v151 = vld [vmem:[#allocation2 + $0xc0] sm:$0xff]
    %v152 = vld [vmem:[#allocation2 + $0xc8] sm:$0xf]
    %v153 = vld [vmem:[#allocation2 + $0xcc] sm:$0xff]
    %v154 = vld [vmem:[#allocation2 + $0xd4] sm:$0xf]
    %v155 = vld [vmem:[#allocation2 + $0xd8] sm:$0xff]
    %v156 = vld [vmem:[#allocation2 + $0xe0] sm:$0xf]
    %v157 = vld [vmem:[#allocation2 + $0xe4] sm:$0xff]
    %v158 = vld [vmem:[#allocation2 + $0xec] sm:$0xf]
    %v159 = vld [vmem:[#allocation2 + $0xf0] sm:$0xff]
    %v160 = vld [vmem:[#allocation2 + $0xf8] sm:$0xf]
    %v161 = vld [vmem:[#allocation2 + $0xfc] sm:$0xff]
    %v162 = vld [vmem:[#allocation2 + $0x104] sm:$0xf]
    %v163 = vld [vmem:[#allocation2 + $0x108] sm:$0xff]
    %v164 = vld [vmem:[#allocation2 + $0x110] sm:$0xf]
    %v165 = vld [vmem:[#allocation2 + $0x114] sm:$0xff]
    %v166 = vld [vmem:[#allocation2 + $0x11c] sm:$0xf]
    %v167 = vld [vmem:[#allocation2 + $0x120] sm:$0xff]
    %v168 = vld [vmem:[#allocation2 + $0x128] sm:$0xf]
    %v169 = vld [vmem:[#allocation2 + $0x12c] sm:$0xff]
    %v170 = vld [vmem:[#allocation2 + $0x134] sm:$0xf]
    %v171 = vld [vmem:[#allocation2 + $0x138] sm:$0xff]
    %v172 = vld [vmem:[#allocation2 + $0x140] sm:$0xf]
    %v173 = vld [vmem:[#allocation2 + $0x144] sm:$0xff]
    %v174 = vld [vmem:[#allocation2 + $0x14c] sm:$0xf]
    %v175 = vld [vmem:[#allocation2 + $0x150] sm:$0xff]
    %v176 = vld [vmem:[#allocation2 + $0x158] sm:$0xf]
    %v177 = vld [vmem:[#allocation2 + $0x15c] sm:$0xff]
    %v178 = vld [vmem:[#allocation2 + $0x164] sm:$0xf]
    %v179 = vld [vmem:[#allocation2 + $0x168] sm:$0xff]
    %v180 = vld [vmem:[#allocation2 + $0x170] sm:$0xf]
    %v181 = vld [vmem:[#allocation2 + $0x174] sm:$0xff]
    %v182 = vld [vmem:[#allocation2 + $0x17c] sm:$0xf]
    %v183 = vld [vmem:[#allocation5] sm:$0xf]
    %v184 = vld [vmem:[#allocation5 + $0x4] sm:$0xf]
    %v185 = vld [vmem:[#allocation5 + $0x8] sm:$0xf]
    %v186 = vld [vmem:[#allocation5 + $0xc] sm:$0xf]
    %v187 = vld [vmem:[#allocation5 + $0x10] sm:$0xf]
    %v188 = vld [vmem:[#allocation5 + $0x14] sm:$0xf]
    %v189 = vld [vmem:[#allocation5 + $0x18] sm:$0xf]
    %v190 = vld [vmem:[#allocation5 + $0x1c] sm:$0xf]
    %v191 = vld [vmem:[#allocation5 + $0x20] sm:$0xf]
    %v192 = vld [vmem:[#allocation5 + $0x24] sm:$0xf]
    %v193 = vld [vmem:[#allocation5 + $0x28] sm:$0xf]
    %v194 = vld [vmem:[#allocation5 + $0x2c] sm:$0xf]
    %v195 = vld [vmem:[#allocation5 + $0x30] sm:$0xf]
    %v196 = vld [vmem:[#allocation5 + $0x34] sm:$0xf]
    %v197 = vld [vmem:[#allocation5 + $0x38] sm:$0xf]
    %v198 = vld [vmem:[#allocation5 + $0x3c] sm:$0xf]
    %v199 = vld [vmem:[#allocation5 + $0x40] sm:$0xf]
    %v200 = vld [vmem:[#allocation5 + $0x44] sm:$0xf]
    %v201 = vld [vmem:[#allocation5 + $0x48] sm:$0xf]
    %v202 = vld [vmem:[#allocation5 + $0x4c] sm:$0xf]
    %v203 = vld [vmem:[#allocation5 + $0x50] sm:$0xf]
    %v204 = vld [vmem:[#allocation5 + $0x54] sm:$0xf]
    %v205 = vld [vmem:[#allocation5 + $0x58] sm:$0xf]
    %v206 = vld [vmem:[#allocation5 + $0x5c] sm:$0xf]
    %v207 = vld [vmem:[#allocation5 + $0x60] sm:$0xf]
    %v208 = vld [vmem:[#allocation5 + $0x64] sm:$0xf]
    %v209 = vld [vmem:[#allocation5 + $0x68] sm:$0xf]
    %v210 = vld [vmem:[#allocation5 + $0x6c] sm:$0xf]
    %v211 = vld [vmem:[#allocation5 + $0x70] sm:$0xf]
    %v212 = vld [vmem:[#allocation5 + $0x74] sm:$0xf]
    %v213 = vld [vmem:[#allocation5 + $0x78] sm:$0xf]
    %v214 = vld [vmem:[#allocation5 + $0x7c] sm:$0xf]
    %v215 = vld [vmem:[#allocation5 + $0x80] sm:$0xf]
    %v216 = vld [vmem:[#allocation5 + $0x84] sm:$0xf]
    %v217 = vld [vmem:[#allocation5 + $0x88] sm:$0xf]
    %v218 = vld [vmem:[#allocation5 + $0x8c] sm:$0xf]
    %v219 = vld [vmem:[#allocation5 + $0x90] sm:$0xf]
    %v220 = vld [vmem:[#allocation5 + $0x94] sm:$0xf]
    %v221 = vld [vmem:[#allocation5 + $0x98] sm:$0xf]
    %v222 = vld [vmem:[#allocation5 + $0x9c] sm:$0xf]
    %v223 = vld [vmem:[#allocation5 + $0xa0] sm:$0xf]
    %v224 = vld [vmem:[#allocation5 + $0xa4] sm:$0xf]
    %v225 = vld [vmem:[#allocation5 + $0xa8] sm:$0xf]
    %v226 = vld [vmem:[#allocation5 + $0xac] sm:$0xf]
    %v227 = vld [vmem:[#allocation5 + $0xb0] sm:$0xf]
    %v228 = vld [vmem:[#allocation5 + $0xb4] sm:$0xf]
    %v229 = vld [vmem:[#allocation5 + $0xb8] sm:$0xf]
    %v230 = vld [vmem:[#allocation5 + $0xbc] sm:$0xf]
    %v295 = vunpack.c.l.b16 %v119
    %v296 = vunpack.c.h.b16 %v119
    %v297 = vunpack.c.l.b16 %v120
    %v298 = vunpack.c.l.b16 %v121
    %v299 = vunpack.c.h.b16 %v121
    %v300 = vunpack.c.l.b16 %v122
    %v301 = vunpack.c.l.b16 %v123
    %v302 = vunpack.c.h.b16 %v123
    %v303 = vunpack.c.l.b16 %v124
    %v304 = vunpack.c.l.b16 %v125
    %v305 = vunpack.c.h.b16 %v125
    %v306 = vunpack.c.l.b16 %v126
    %v307 = vunpack.c.l.b16 %v127
    %v308 = vunpack.c.h.b16 %v127
    %v309 = vunpack.c.l.b16 %v128
    %v310 = vunpack.c.l.b16 %v129
    %v311 = vunpack.c.h.b16 %v129
    %v312 = vunpack.c.l.b16 %v130
    %v313 = vunpack.c.l.b16 %v131
    %v314 = vunpack.c.h.b16 %v131
    %v315 = vunpack.c.l.b16 %v132
    %v316 = vunpack.c.l.b16 %v133
    %v317 = vunpack.c.h.b16 %v133
    %v318 = vunpack.c.l.b16 %v134
    %v319 = vunpack.c.l.b16 %v135
    %v320 = vunpack.c.h.b16 %v135
    %v321 = vunpack.c.l.b16 %v136
    %v322 = vunpack.c.l.b16 %v137
    %v323 = vunpack.c.h.b16 %v137
    %v324 = vunpack.c.l.b16 %v138
    %v325 = vunpack.c.l.b16 %v139
    %v326 = vunpack.c.h.b16 %v139
    %v327 = vunpack.c.l.b16 %v140
    %v328 = vunpack.c.l.b16 %v141
    %v329 = vunpack.c.h.b16 %v141
    %v330 = vunpack.c.l.b16 %v142
    %v331 = vunpack.c.l.b16 %v143
    %v332 = vunpack.c.h.b16 %v143
    %v333 = vunpack.c.l.b16 %v144
    %v334 = vunpack.c.l.b16 %v145
    %v335 = vunpack.c.h.b16 %v145
    %v336 = vunpack.c.l.b16 %v146
    %v337 = vunpack.c.l.b16 %v147
    %v338 = vunpack.c.h.b16 %v147
    %v339 = vunpack.c.l.b16 %v148
    %v340 = vunpack.c.l.b16 %v149
    %v341 = vunpack.c.h.b16 %v149
    %v342 = vunpack.c.l.b16 %v150
    %v343 = vunpack.c.l.b16 %v151
    %v344 = vunpack.c.h.b16 %v151
    %v345 = vunpack.c.l.b16 %v152
    %v346 = vunpack.c.l.b16 %v153
    %v347 = vunpack.c.h.b16 %v153
    %v348 = vunpack.c.l.b16 %v154
    %v349 = vunpack.c.l.b16 %v155
    %v350 = vunpack.c.h.b16 %v155
    %v351 = vunpack.c.l.b16 %v156
    %v352 = vunpack.c.l.b16 %v157
    %v353 = vunpack.c.h.b16 %v157
    %v354 = vunpack.c.l.b16 %v158
    %v355 = vunpack.c.l.b16 %v159
    %v356 = vunpack.c.h.b16 %v159
    %v357 = vunpack.c.l.b16 %v160
    %v358 = vunpack.c.l.b16 %v161
    %v359 = vunpack.c.h.b16 %v161
    %v360 = vunpack.c.l.b16 %v162
    %v361 = vunpack.c.l.b16 %v163
    %v362 = vunpack.c.h.b16 %v163
    %v363 = vunpack.c.l.b16 %v164
    %v364 = vunpack.c.l.b16 %v165
    %v365 = vunpack.c.h.b16 %v165
    %v366 = vunpack.c.l.b16 %v166
    %v367 = vunpack.c.l.b16 %v167
    %v368 = vunpack.c.h.b16 %v167
    %v369 = vunpack.c.l.b16 %v168
    %v370 = vunpack.c.l.b16 %v169
    %v371 = vunpack.c.h.b16 %v169
    %v372 = vunpack.c.l.b16 %v170
    %v373 = vunpack.c.l.b16 %v171
    %v374 = vunpack.c.h.b16 %v171
    %v375 = vunpack.c.l.b16 %v172
    %v376 = vunpack.c.l.b16 %v173
    %v377 = vunpack.c.h.b16 %v173
    %v378 = vunpack.c.l.b16 %v174
    %v379 = vunpack.c.l.b16 %v175
    %v380 = vunpack.c.h.b16 %v175
    %v381 = vunpack.c.l.b16 %v176
    %v382 = vunpack.c.l.b16 %v177
    %v383 = vunpack.c.h.b16 %v177
    %v384 = vunpack.c.l.b16 %v178
    %v385 = vunpack.c.l.b16 %v179
    %v386 = vunpack.c.h.b16 %v179
    %v387 = vunpack.c.l.b16 %v180
    %v388 = vunpack.c.l.b16 %v181
    %v389 = vunpack.c.h.b16 %v181
    %v390 = vunpack.c.l.b16 %v182
    %v391 = vpack.c.b16 %v298, %v295
    %v392 = vpack.c.b16 %v299, %v296
    %v393 = vpack.c.b16 %v300, %v297
    %v394 = vpack.c.b16 %v304, %v301
    %v395 = vpack.c.b16 %v305, %v302
    %v396 = vpack.c.b16 %v306, %v303
    %v397 = vpack.c.b16 %v310, %v307
    %v398 = vpack.c.b16 %v311, %v308
    %v399 = vpack.c.b16 %v312, %v309
    %v400 = vpack.c.b16 %v316, %v313
    %v401 = vpack.c.b16 %v317, %v314
    %v402 = vpack.c.b16 %v318, %v315
    %v403 = vpack.c.b16 %v322, %v319
    %v404 = vpack.c.b16 %v323, %v320
    %v405 = vpack.c.b16 %v324, %v321
    %v406 = vpack.c.b16 %v328, %v325
    %v407 = vpack.c.b16 %v329, %v326
    %v408 = vpack.c.b16 %v330, %v327
    %v409 = vpack.c.b16 %v334, %v331
    %v410 = vpack.c.b16 %v335, %v332
    %v411 = vpack.c.b16 %v336, %v333
    %v412 = vpack.c.b16 %v340, %v337
    %v413 = vpack.c.b16 %v341, %v338
    %v414 = vpack.c.b16 %v342, %v339
    %v415 = vpack.c.b16 %v346, %v343
    %v416 = vpack.c.b16 %v347, %v344
    %v417 = vpack.c.b16 %v348, %v345
    %v418 = vpack.c.b16 %v352, %v349
    %v419 = vpack.c.b16 %v353, %v350
    %v420 = vpack.c.b16 %v354, %v351
    %v421 = vpack.c.b16 %v358, %v355
    %v422 = vpack.c.b16 %v359, %v356
    %v423 = vpack.c.b16 %v360, %v357
    %v424 = vpack.c.b16 %v364, %v361
    %v425 = vpack.c.b16 %v365, %v362
    %v426 = vpack.c.b16 %v366, %v363
    %v427 = vpack.c.b16 %v370, %v367
    %v428 = vpack.c.b16 %v371, %v368
    %v429 = vpack.c.b16 %v372, %v369
    %v430 = vpack.c.b16 %v376, %v373
    %v431 = vpack.c.b16 %v377, %v374
    %v432 = vpack.c.b16 %v378, %v375
    %v433 = vpack.c.b16 %v382, %v379
    %v434 = vpack.c.b16 %v383, %v380
    %v435 = vpack.c.b16 %v384, %v381
    %v436 = vpack.c.b16 %v388, %v385
    %v437 = vpack.c.b16 %v389, %v386
    %v438 = vpack.c.b16 %v390, %v387
    %v535 = vunpack.c.l.b16 %v183
    %v536 = vunpack.c.l.b16 %v184
    %v537 = vunpack.c.l.b16 %v185
    %v538 = vunpack.c.l.b16 %v186
    %v539 = vunpack.c.l.b16 %v187
    %v540 = vunpack.c.l.b16 %v188
    %v541 = vunpack.c.l.b16 %v189
    %v542 = vunpack.c.l.b16 %v190
    %v543 = vunpack.c.l.b16 %v191
    %v544 = vunpack.c.l.b16 %v192
    %v545 = vunpack.c.l.b16 %v193
    %v546 = vunpack.c.l.b16 %v194
    %v547 = vunpack.c.l.b16 %v195
    %v548 = vunpack.c.l.b16 %v196
    %v549 = vunpack.c.l.b16 %v197
    %v550 = vunpack.c.l.b16 %v198
    %v551 = vunpack.c.l.b16 %v199
    %v552 = vunpack.c.l.b16 %v200
    %v553 = vunpack.c.l.b16 %v201
    %v554 = vunpack.c.l.b16 %v202
    %v555 = vunpack.c.l.b16 %v203
    %v556 = vunpack.c.l.b16 %v204
    %v557 = vunpack.c.l.b16 %v205
    %v558 = vunpack.c.l.b16 %v206
    %v559 = vunpack.c.l.b16 %v207
    %v560 = vunpack.c.l.b16 %v208
    %v561 = vunpack.c.l.b16 %v209
    %v562 = vunpack.c.l.b16 %v210
    %v563 = vunpack.c.l.b16 %v211
    %v564 = vunpack.c.l.b16 %v212
    %v565 = vunpack.c.l.b16 %v213
    %v566 = vunpack.c.l.b16 %v214
    %v567 = vunpack.c.l.b16 %v215
    %v568 = vunpack.c.l.b16 %v216
    %v569 = vunpack.c.l.b16 %v217
    %v570 = vunpack.c.l.b16 %v218
    %v571 = vunpack.c.l.b16 %v219
    %v572 = vunpack.c.l.b16 %v220
    %v573 = vunpack.c.l.b16 %v221
    %v574 = vunpack.c.l.b16 %v222
    %v575 = vunpack.c.l.b16 %v223
    %v576 = vunpack.c.l.b16 %v224
    %v577 = vunpack.c.l.b16 %v225
    %v578 = vunpack.c.l.b16 %v226
    %v579 = vunpack.c.l.b16 %v227
    %v580 = vunpack.c.l.b16 %v228
    %v581 = vunpack.c.l.b16 %v229
    %v582 = vunpack.c.l.b16 %v230
    %v583 = vpack.c.b16 %v536, %v535
    %v584 = vpack.c.b16 %v538, %v537
    %v585 = vpack.c.b16 %v540, %v539
    %v586 = vpack.c.b16 %v542, %v541
    %v587 = vpack.c.b16 %v544, %v543
    %v588 = vpack.c.b16 %v546, %v545
    %v589 = vpack.c.b16 %v548, %v547
    %v590 = vpack.c.b16 %v550, %v549
    %v591 = vpack.c.b16 %v552, %v551
    %v592 = vpack.c.b16 %v554, %v553
    %v593 = vpack.c.b16 %v556, %v555
    %v594 = vpack.c.b16 %v558, %v557
    %v595 = vpack.c.b16 %v560, %v559
    %v596 = vpack.c.b16 %v562, %v561
    %v597 = vpack.c.b16 %v564, %v563
    %v598 = vpack.c.b16 %v566, %v565
    %v599 = vpack.c.b16 %v568, %v567
    %v600 = vpack.c.b16 %v570, %v569
    %v601 = vpack.c.b16 %v572, %v571
    %v602 = vpack.c.b16 %v574, %v573
    %v603 = vpack.c.b16 %v576, %v575
    %v604 = vpack.c.b16 %v578, %v577
    %v605 = vpack.c.b16 %v580, %v579
    %v606 = vpack.c.b16 %v582, %v581
    %631 = vmatpush.bf16.msra.mxu0 %v590
    %632 = vmatpush.bf16.msra.mxu0 %v589
    %633 = vmatpush.bf16.msra.mxu0 %v588
    %634 = vmatpush.bf16.msra.mxu0 %v587
    %635 = vmatpush.bf16.msra.mxu0 %v586
    %636 = vmatpush.bf16.msra.mxu0 %v585
    %637 = vmatpush.bf16.msra.mxu0 %v584
    %638 = vmatpush.bf16.msra.mxu0 %v583
    %639 = vmatmul.bf16.gmra.mxu0 %v391
    %v640 = vpop.f32.mrf.mxu0
    %v641 = vadd.f32 0.0, %v640
    %v642 = vpop.f32.mrf.mxu0
    %v643 = vadd.f32 0.0, %v642
    %644 = vmatmul.bf16.gmra.mxu0 %v394
    %v645 = vpop.f32.mrf.mxu0
    %v646 = vadd.f32 0.0, %v645
    %v647 = vpop.f32.mrf.mxu0
    %v648 = vadd.f32 0.0, %v647
    %649 = vmatmul.bf16.gmra.mxu0 %v397
    %v650 = vpop.f32.mrf.mxu0
    %v651 = vadd.f32 0.0, %v650
    %v652 = vpop.f32.mrf.mxu0
    %v653 = vadd.f32 0.0, %v652
    %654 = vmatmul.bf16.gmra.mxu0 %v400
    %v655 = vpop.f32.mrf.mxu0
    %v656 = vadd.f32 0.0, %v655
    %v657 = vpop.f32.mrf.mxu0
    %v658 = vadd.f32 0.0, %v657
    %659 = vmatmul.bf16.gmra.mxu0 %v403
    %v660 = vpop.f32.mrf.mxu0
    %v661 = vadd.f32 0.0, %v660
    %v662 = vpop.f32.mrf.mxu0
    %v663 = vadd.f32 0.0, %v662
    %664 = vmatmul.bf16.gmra.mxu0 %v406
    %v665 = vpop.f32.mrf.mxu0
    %v666 = vadd.f32 0.0, %v665
    %v667 = vpop.f32.mrf.mxu0
    %v668 = vadd.f32 0.0, %v667
    %669 = vmatmul.bf16.gmra.mxu0 %v409
    %v670 = vpop.f32.mrf.mxu0
    %v671 = vadd.f32 0.0, %v670
    %v672 = vpop.f32.mrf.mxu0
    %v673 = vadd.f32 0.0, %v672
    %674 = vmatmul.bf16.gmra.mxu0 %v412
    %v675 = vpop.f32.mrf.mxu0
    %v676 = vadd.f32 0.0, %v675
    %v677 = vpop.f32.mrf.mxu0
    %v678 = vadd.f32 0.0, %v677
    %679 = vmatmul.bf16.gmra.mxu0 %v415
    %v680 = vpop.f32.mrf.mxu0
    %v681 = vadd.f32 0.0, %v680
    %v682 = vpop.f32.mrf.mxu0
    %v683 = vadd.f32 0.0, %v682
    %684 = vmatmul.bf16.gmra.mxu0 %v418
    %v685 = vpop.f32.mrf.mxu0
    %v686 = vadd.f32 0.0, %v685
    %v687 = vpop.f32.mrf.mxu0
    %v688 = vadd.f32 0.0, %v687
    %689 = vmatmul.bf16.gmra.mxu0 %v421
    %v690 = vpop.f32.mrf.mxu0
    %v691 = vadd.f32 0.0, %v690
    %v692 = vpop.f32.mrf.mxu0
    %v693 = vadd.f32 0.0, %v692
    %694 = vmatmul.bf16.gmra.mxu0 %v424
    %v695 = vpop.f32.mrf.mxu0
    %v696 = vadd.f32 0.0, %v695
    %v697 = vpop.f32.mrf.mxu0
    %v698 = vadd.f32 0.0, %v697
    %699 = vmatmul.bf16.gmra.mxu0 %v427
    %v700 = vpop.f32.mrf.mxu0
    %v701 = vadd.f32 0.0, %v700
    %v702 = vpop.f32.mrf.mxu0
    %v703 = vadd.f32 0.0, %v702
    %704 = vmatmul.bf16.gmra.mxu0 %v430
    %v705 = vpop.f32.mrf.mxu0
    %v706 = vadd.f32 0.0, %v705
    %v707 = vpop.f32.mrf.mxu0
    %v708 = vadd.f32 0.0, %v707
    %709 = vmatmul.bf16.gmra.mxu0 %v433
    %v710 = vpop.f32.mrf.mxu0
    %v711 = vadd.f32 0.0, %v710
    %v712 = vpop.f32.mrf.mxu0
    %v713 = vadd.f32 0.0, %v712
    %714 = vmatmul.bf16.gmra.mxu0 %v436
    %v715 = vpop.f32.mrf.mxu0
    %v716 = vadd.f32 0.0, %v715
    %v717 = vpop.f32.mrf.mxu0
    %v718 = vadd.f32 0.0, %v717
    %719 = vdwg.mxu0
    %720 = vmatpush.bf16.msra.mxu0 %v598
    %721 = vmatpush.bf16.msra.mxu0 %v597
    %722 = vmatpush.bf16.msra.mxu0 %v596
    %723 = vmatpush.bf16.msra.mxu0 %v595
    %724 = vmatpush.bf16.msra.mxu0 %v594
    %725 = vmatpush.bf16.msra.mxu0 %v593
    %726 = vmatpush.bf16.msra.mxu0 %v592
    %727 = vmatpush.bf16.msra.mxu0 %v591
    %728 = vmatmul.bf16.gmra.mxu0 %v392
    %v729 = vpop.f32.mrf.mxu0
    %v730 = vadd.f32 %v641, %v729
    %v731 = vpop.f32.mrf.mxu0
    %v732 = vadd.f32 %v643, %v731
    %733 = vmatmul.bf16.gmra.mxu0 %v395
    %v734 = vpop.f32.mrf.mxu0
    %v735 = vadd.f32 %v646, %v734
    %v736 = vpop.f32.mrf.mxu0
    %v737 = vadd.f32 %v648, %v736
    %738 = vmatmul.bf16.gmra.mxu0 %v398
    %v739 = vpop.f32.mrf.mxu0
    %v740 = vadd.f32 %v651, %v739
    %v741 = vpop.f32.mrf.mxu0
    %v742 = vadd.f32 %v653, %v741
    %743 = vmatmul.bf16.gmra.mxu0 %v401
    %v744 = vpop.f32.mrf.mxu0
    %v745 = vadd.f32 %v656, %v744
    %v746 = vpop.f32.mrf.mxu0
    %v747 = vadd.f32 %v658, %v746
    %748 = vmatmul.bf16.gmra.mxu0 %v404
    %v749 = vpop.f32.mrf.mxu0
    %v750 = vadd.f32 %v661, %v749
    %v751 = vpop.f32.mrf.mxu0
    %v752 = vadd.f32 %v663, %v751
    %753 = vmatmul.bf16.gmra.mxu0 %v407
    %v754 = vpop.f32.mrf.mxu0
    %v755 = vadd.f32 %v666, %v754
    %v756 = vpop.f32.mrf.mxu0
    %v757 = vadd.f32 %v668, %v756
    %758 = vmatmul.bf16.gmra.mxu0 %v410
    %v759 = vpop.f32.mrf.mxu0
    %v760 = vadd.f32 %v671, %v759
    %v761 = vpop.f32.mrf.mxu0
    %v762 = vadd.f32 %v673, %v761
    %763 = vmatmul.bf16.gmra.mxu0 %v413
    %v764 = vpop.f32.mrf.mxu0
    %v765 = vadd.f32 %v676, %v764
    %v766 = vpop.f32.mrf.mxu0
    %v767 = vadd.f32 %v678, %v766
    %768 = vmatmul.bf16.gmra.mxu0 %v416
    %v769 = vpop.f32.mrf.mxu0
    %v770 = vadd.f32 %v681, %v769
    %v771 = vpop.f32.mrf.mxu0
    %v772 = vadd.f32 %v683, %v771
    %773 = vmatmul.bf16.gmra.mxu0 %v419
    %v774 = vpop.f32.mrf.mxu0
    %v775 = vadd.f32 %v686, %v774
    %v776 = vpop.f32.mrf.mxu0
    %v777 = vadd.f32 %v688, %v776
    %778 = vmatmul.bf16.gmra.mxu0 %v422
    %v779 = vpop.f32.mrf.mxu0
    %v780 = vadd.f32 %v691, %v779
    %v781 = vpop.f32.mrf.mxu0
    %v782 = vadd.f32 %v693, %v781
    %783 = vmatmul.bf16.gmra.mxu0 %v425
    %v784 = vpop.f32.mrf.mxu0
    %v785 = vadd.f32 %v696, %v784
    %v786 = vpop.f32.mrf.mxu0
    %v787 = vadd.f32 %v698, %v786
    %788 = vmatmul.bf16.gmra.mxu0 %v428
    %v789 = vpop.f32.mrf.mxu0
    %v790 = vadd.f32 %v701, %v789
    %v791 = vpop.f32.mrf.mxu0
    %v792 = vadd.f32 %v703, %v791
    %793 = vmatmul.bf16.gmra.mxu0 %v431
    %v794 = vpop.f32.mrf.mxu0
    %v795 = vadd.f32 %v706, %v794
    %v796 = vpop.f32.mrf.mxu0
    %v797 = vadd.f32 %v708, %v796
    %798 = vmatmul.bf16.gmra.mxu0 %v434
    %v799 = vpop.f32.mrf.mxu0
    %v800 = vadd.f32 %v711, %v799
    %v801 = vpop.f32.mrf.mxu0
    %v802 = vadd.f32 %v713, %v801
    %803 = vmatmul.bf16.gmra.mxu0 %v437
    %v804 = vpop.f32.mrf.mxu0
    %v805 = vadd.f32 %v716, %v804
    %v806 = vpop.f32.mrf.mxu0
    %v807 = vadd.f32 %v718, %v806
    %808 = vdwg.mxu0
    %809 = vmatpush.bf16.msra.mxu0 %v606
    %810 = vmatpush.bf16.msra.mxu0 %v605
    %811 = vmatpush.bf16.msra.mxu0 %v604
    %812 = vmatpush.bf16.msra.mxu0 %v603
    %813 = vmatpush.bf16.msra.mxu0 %v602
    %814 = vmatpush.bf16.msra.mxu0 %v601
    %815 = vmatpush.bf16.msra.mxu0 %v600
    %816 = vmatpush.bf16.msra.mxu0 %v599
    %817 = vmatmul.bf16.gmra.mxu0 %v393
    %v818 = vpop.f32.mrf.mxu0
    %v819 = vadd.f32 %v730, %v818
    %v820 = vpop.f32.mrf.mxu0
    %v821 = vadd.f32 %v732, %v820
    %822 = vmatmul.bf16.gmra.mxu0 %v396
    %v823 = vpop.f32.mrf.mxu0
    %v824 = vadd.f32 %v735, %v823
    %v825 = vpop.f32.mrf.mxu0
    %v826 = vadd.f32 %v737, %v825
    %827 = vmatmul.bf16.gmra.mxu0 %v399
    %v828 = vpop.f32.mrf.mxu0
    %v829 = vadd.f32 %v740, %v828
    %v830 = vpop.f32.mrf.mxu0
    %v831 = vadd.f32 %v742, %v830
    %832 = vmatmul.bf16.gmra.mxu0 %v402
    %v833 = vpop.f32.mrf.mxu0
    %v834 = vadd.f32 %v745, %v833
    %v835 = vpop.f32.mrf.mxu0
    %v836 = vadd.f32 %v747, %v835
    %837 = vmatmul.bf16.gmra.mxu0 %v405
    %v838 = vpop.f32.mrf.mxu0
    %v839 = vadd.f32 %v750, %v838
    %v840 = vpop.f32.mrf.mxu0
    %v841 = vadd.f32 %v752, %v840
    %842 = vmatmul.bf16.gmra.mxu0 %v408
    %v843 = vpop.f32.mrf.mxu0
    %v844 = vadd.f32 %v755, %v843
    %v845 = vpop.f32.mrf.mxu0
    %v846 = vadd.f32 %v757, %v845
    %847 = vmatmul.bf16.gmra.mxu0 %v411
    %v848 = vpop.f32.mrf.mxu0
    %v849 = vadd.f32 %v760, %v848
    %v850 = vpop.f32.mrf.mxu0
    %v851 = vadd.f32 %v762, %v850
    %852 = vmatmul.bf16.gmra.mxu0 %v414
    %v853 = vpop.f32.mrf.mxu0
    %v854 = vadd.f32 %v765, %v853
    %v855 = vpop.f32.mrf.mxu0
    %v856 = vadd.f32 %v767, %v855
    %857 = vmatmul.bf16.gmra.mxu0 %v417
    %v858 = vpop.f32.mrf.mxu0
    %v859 = vadd.f32 %v770, %v858
    %v860 = vpop.f32.mrf.mxu0
    %v861 = vadd.f32 %v772, %v860
    %862 = vmatmul.bf16.gmra.mxu0 %v420
    %v863 = vpop.f32.mrf.mxu0
    %v864 = vadd.f32 %v775, %v863
    %v865 = vpop.f32.mrf.mxu0
    %v866 = vadd.f32 %v777, %v865
    %867 = vmatmul.bf16.gmra.mxu0 %v423
    %v868 = vpop.f32.mrf.mxu0
    %v869 = vadd.f32 %v780, %v868
    %v870 = vpop.f32.mrf.mxu0
    %v871 = vadd.f32 %v782, %v870
    %872 = vmatmul.bf16.gmra.mxu0 %v426
    %v873 = vpop.f32.mrf.mxu0
    %v874 = vadd.f32 %v785, %v873
    %v875 = vpop.f32.mrf.mxu0
    %v876 = vadd.f32 %v787, %v875
    %877 = vmatmul.bf16.gmra.mxu0 %v429
    %v878 = vpop.f32.mrf.mxu0
    %v879 = vadd.f32 %v790, %v878
    %v880 = vpop.f32.mrf.mxu0
    %v881 = vadd.f32 %v792, %v880
    %882 = vmatmul.bf16.gmra.mxu0 %v432
    %v883 = vpop.f32.mrf.mxu0
    %v884 = vadd.f32 %v795, %v883
    %v885 = vpop.f32.mrf.mxu0
    %v886 = vadd.f32 %v797, %v885
    %887 = vmatmul.bf16.gmra.mxu0 %v435
    %v888 = vpop.f32.mrf.mxu0
    %v889 = vadd.f32 %v800, %v888
    %v890 = vpop.f32.mrf.mxu0
    %v891 = vadd.f32 %v802, %v890
    %892 = vmatmul.bf16.gmra.mxu0 %v438
    %v893 = vpop.f32.mrf.mxu0
    %v894 = vadd.f32 %v805, %v893
    %v895 = vpop.f32.mrf.mxu0
    %v896 = vadd.f32 %v807, %v895
    %897 = vdwg.mxu0
    %v898 = vadd.f32 %v87, %v819
    %v899 = vadd.f32 %v88, %v821
    %v900 = vadd.f32 %v89, %v824
    %v901 = vadd.f32 %v90, %v826
    %v902 = vadd.f32 %v91, %v829
    %v903 = vadd.f32 %v92, %v831
    %v904 = vadd.f32 %v93, %v834
    %v905 = vadd.f32 %v94, %v836
    %v906 = vadd.f32 %v95, %v839
    %v907 = vadd.f32 %v96, %v841
    %v908 = vadd.f32 %v97, %v844
    %v909 = vadd.f32 %v98, %v846
    %v910 = vadd.f32 %v99, %v849
    %v911 = vadd.f32 %v100, %v851
    %v912 = vadd.f32 %v101, %v854
    %v913 = vadd.f32 %v102, %v856
    %v914 = vadd.f32 %v103, %v859
    %v915 = vadd.f32 %v104, %v861
    %v916 = vadd.f32 %v105, %v864
    %v917 = vadd.f32 %v106, %v866
    %v918 = vadd.f32 %v107, %v869
    %v919 = vadd.f32 %v108, %v871
    %v920 = vadd.f32 %v109, %v874
    %v921 = vadd.f32 %v110, %v876
    %v922 = vadd.f32 %v111, %v879
    %v923 = vadd.f32 %v112, %v881
    %v924 = vadd.f32 %v113, %v884
    %v925 = vadd.f32 %v114, %v886
    %v926 = vadd.f32 %v115, %v889
    %v927 = vadd.f32 %v116, %v891
    %v928 = vadd.f32 %v117, %v894
    %v929 = vadd.f32 %v118, %v896
    %930 = vst [vmem:[#allocation7] sm:$0xff] %v898
    %931 = vst [vmem:[#allocation7 + $0x8] sm:$0xff] %v899
    %932 = vst [vmem:[#allocation7 + $0x10] sm:$0xff] %v900
    %933 = vst [vmem:[#allocation7 + $0x18] sm:$0xff] %v901
    %934 = vst [vmem:[#allocation7 + $0x20] sm:$0xff] %v902
    %935 = vst [vmem:[#allocation7 + $0x28] sm:$0xff] %v903
    %936 = vst [vmem:[#allocation7 + $0x30] sm:$0xff] %v904
    %937 = vst [vmem:[#allocation7 + $0x38] sm:$0xff] %v905
    %938 = vst [vmem:[#allocation7 + $0x40] sm:$0xff] %v906
    %939 = vst [vmem:[#allocation7 + $0x48] sm:$0xff] %v907
    %940 = vst [vmem:[#allocation7 + $0x50] sm:$0xff] %v908
    %941 = vst [vmem:[#allocation7 + $0x58] sm:$0xff] %v909
    %942 = vst [vmem:[#allocation7 + $0x60] sm:$0xff] %v910
    %943 = vst [vmem:[#allocation7 + $0x68] sm:$0xff] %v911
    %944 = vst [vmem:[#allocation7 + $0x70] sm:$0xff] %v912
    %945 = vst [vmem:[#allocation7 + $0x78] sm:$0xff] %v913
    %946 = vst [vmem:[#allocation7 + $0x80] sm:$0xff] %v914
    %947 = vst [vmem:[#allocation7 + $0x88] sm:$0xff] %v915
    %948 = vst [vmem:[#allocation7 + $0x90] sm:$0xff] %v916
    %949 = vst [vmem:[#allocation7 + $0x98] sm:$0xff] %v917
    %950 = vst [vmem:[#allocation7 + $0xa0] sm:$0xff] %v918
    %951 = vst [vmem:[#allocation7 + $0xa8] sm:$0xff] %v919
    %952 = vst [vmem:[#allocation7 + $0xb0] sm:$0xff] %v920
    %953 = vst [vmem:[#allocation7 + $0xb8] sm:$0xff] %v921
    %954 = vst [vmem:[#allocation7 + $0xc0] sm:$0xff] %v922
    %955 = vst [vmem:[#allocation7 + $0xc8] sm:$0xff] %v923
    %956 = vst [vmem:[#allocation7 + $0xd0] sm:$0xff] %v924
    %957 = vst [vmem:[#allocation7 + $0xd8] sm:$0xff] %v925
    %958 = vst [vmem:[#allocation7 + $0xe0] sm:$0xff] %v926
    %959 = vst [vmem:[#allocation7 + $0xe8] sm:$0xff] %v927
    %960 = vst [vmem:[#allocation7 + $0xf0] sm:$0xff] %v928
    %961 = vst [vmem:[#allocation7 + $0xf8] sm:$0xff] %v929
    // Predicated region
    $region26: #{tpu_custom_call.1} parent=1 // pred_check
      %p962 = pneg %p47
    $region27: #{tpu_custom_call.1} parent=1 // pred_check_branch
      %964 = sbr.rel (%p962) target = $region29
    $region28: #{tpu_custom_call.1} parent=1 // pred_region
      %v965 = vld [vmem:[#allocation7] sm:$0xff]
      %v966 = vld [vmem:[#allocation7 + $0x8] sm:$0xff]
      %v967 = vld [vmem:[#allocation7 + $0x10] sm:$0xff]
      %v968 = vld [vmem:[#allocation7 + $0x18] sm:$0xff]
      %v969 = vld [vmem:[#allocation7 + $0x20] sm:$0xff]
      %v970 = vld [vmem:[#allocation7 + $0x28] sm:$0xff]
      %v971 = vld [vmem:[#allocation7 + $0x30] sm:$0xff]
      %v972 = vld [vmem:[#allocation7 + $0x38] sm:$0xff]
      %v973 = vld [vmem:[#allocation7 + $0x40] sm:$0xff]
      %v974 = vld [vmem:[#allocation7 + $0x48] sm:$0xff]
      %v975 = vld [vmem:[#allocation7 + $0x50] sm:$0xff]
      %v976 = vld [vmem:[#allocation7 + $0x58] sm:$0xff]
      %v977 = vld [vmem:[#allocation7 + $0x60] sm:$0xff]
      %v978 = vld [vmem:[#allocation7 + $0x68] sm:$0xff]
      %v979 = vld [vmem:[#allocation7 + $0x70] sm:$0xff]
      %v980 = vld [vmem:[#allocation7 + $0x78] sm:$0xff]
      %v981 = vld [vmem:[#allocation7 + $0x80] sm:$0xff]
      %v982 = vld [vmem:[#allocation7 + $0x88] sm:$0xff]
      %v983 = vld [vmem:[#allocation7 + $0x90] sm:$0xff]
      %v984 = vld [vmem:[#allocation7 + $0x98] sm:$0xff]
      %v985 = vld [vmem:[#allocation7 + $0xa0] sm:$0xff]
      %v986 = vld [vmem:[#allocation7 + $0xa8] sm:$0xff]
      %v987 = vld [vmem:[#allocation7 + $0xb0] sm:$0xff]
      %v988 = vld [vmem:[#allocation7 + $0xb8] sm:$0xff]
      %v989 = vld [vmem:[#allocation7 + $0xc0] sm:$0xff]
      %v990 = vld [vmem:[#allocation7 + $0xc8] sm:$0xff]
      %v991 = vld [vmem:[#allocation7 + $0xd0] sm:$0xff]
      %v992 = vld [vmem:[#allocation7 + $0xd8] sm:$0xff]
      %v993 = vld [vmem:[#allocation7 + $0xe0] sm:$0xff]
      %v994 = vld [vmem:[#allocation7 + $0xe8] sm:$0xff]
      %v995 = vld [vmem:[#allocation7 + $0xf0] sm:$0xff]
      %v996 = vld [vmem:[#allocation7 + $0xf8] sm:$0xff]
      %v997 = vmax.f32 %v965, 0.0
      %v998 = vmax.f32 %v966, 0.0
      %v999 = vmax.f32 %v967, 0.0
      %v1000 = vmax.f32 %v968, 0.0
      %v1001 = vmax.f32 %v969, 0.0
      %v1002 = vmax.f32 %v970, 0.0
      %v1003 = vmax.f32 %v971, 0.0
      %v1004 = vmax.f32 %v972, 0.0
      %v1005 = vmax.f32 %v973, 0.0
      %v1006 = vmax.f32 %v974, 0.0
      %v1007 = vmax.f32 %v975, 0.0
      %v1008 = vmax.f32 %v976, 0.0
      %v1009 = vmax.f32 %v977, 0.0
      %v1010 = vmax.f32 %v978, 0.0
      %v1011 = vmax.f32 %v979, 0.0
      %v1012 = vmax.f32 %v980, 0.0
      %v1013 = vmax.f32 %v981, 0.0
      %v1014 = vmax.f32 %v982, 0.0
      %v1015 = vmax.f32 %v983, 0.0
      %v1016 = vmax.f32 %v984, 0.0
      %v1017 = vmax.f32 %v985, 0.0
      %v1018 = vmax.f32 %v986, 0.0
      %v1019 = vmax.f32 %v987, 0.0
      %v1020 = vmax.f32 %v988, 0.0
      %v1021 = vmax.f32 %v989, 0.0
      %v1022 = vmax.f32 %v990, 0.0
      %v1023 = vmax.f32 %v991, 0.0
      %v1024 = vmax.f32 %v992, 0.0
      %v1025 = vmax.f32 %v993, 0.0
      %v1026 = vmax.f32 %v994, 0.0
      %v1027 = vmax.f32 %v995, 0.0
      %v1028 = vmax.f32 %v996, 0.0
      %1029 = vst [vmem:[#allocation7] sm:$0xff] %v997
      %1030 = vst [vmem:[#allocation7 + $0x8] sm:$0xff] %v998
      %1031 = vst [vmem:[#allocation7 + $0x10] sm:$0xff] %v999
      %1032 = vst [vmem:[#allocation7 + $0x18] sm:$0xff] %v1000
      %1033 = vst [vmem:[#allocation7 + $0x20] sm:$0xff] %v1001
      %1034 = vst [vmem:[#allocation7 + $0x28] sm:$0xff] %v1002
      %1035 = vst [vmem:[#allocation7 + $0x30] sm:$0xff] %v1003
      %1036 = vst [vmem:[#allocation7 + $0x38] sm:$0xff] %v1004
      %1037 = vst [vmem:[#allocation7 + $0x40] sm:$0xff] %v1005
      %1038 = vst [vmem:[#allocation7 + $0x48] sm:$0xff] %v1006
      %1039 = vst [vmem:[#allocation7 + $0x50] sm:$0xff] %v1007
      %1040 = vst [vmem:[#allocation7 + $0x58] sm:$0xff] %v1008
      %1041 = vst [vmem:[#allocation7 + $0x60] sm:$0xff] %v1009
      %1042 = vst [vmem:[#allocation7 + $0x68] sm:$0xff] %v1010
      %1043 = vst [vmem:[#allocation7 + $0x70] sm:$0xff] %v1011
      %1044 = vst [vmem:[#allocation7 + $0x78] sm:$0xff] %v1012
      %1045 = vst [vmem:[#allocation7 + $0x80] sm:$0xff] %v1013
      %1046 = vst [vmem:[#allocation7 + $0x88] sm:$0xff] %v1014
      %1047 = vst [vmem:[#allocation7 + $0x90] sm:$0xff] %v1015
      %1048 = vst [vmem:[#allocation7 + $0x98] sm:$0xff] %v1016
      %1049 = vst [vmem:[#allocation7 + $0xa0] sm:$0xff] %v1017
      %1050 = vst [vmem:[#allocation7 + $0xa8] sm:$0xff] %v1018
      %1051 = vst [vmem:[#allocation7 + $0xb0] sm:$0xff] %v1019
      %1052 = vst [vmem:[#allocation7 + $0xb8] sm:$0xff] %v1020
      %1053 = vst [vmem:[#allocation7 + $0xc0] sm:$0xff] %v1021
      %1054 = vst [vmem:[#allocation7 + $0xc8] sm:$0xff] %v1022
      %1055 = vst [vmem:[#allocation7 + $0xd0] sm:$0xff] %v1023
      %1056 = vst [vmem:[#allocation7 + $0xd8] sm:$0xff] %v1024
      %1057 = vst [vmem:[#allocation7 + $0xe0] sm:$0xff] %v1025
      %1058 = vst [vmem:[#allocation7 + $0xe8] sm:$0xff] %v1026
      %1059 = vst [vmem:[#allocation7 + $0xf0] sm:$0xff] %v1027
      %1060 = vst [vmem:[#allocation7 + $0xf8] sm:$0xff] %v1028
    $region29: #{tpu_custom_call.1} parent=1 // pred_fallthru
      _
    // Predicated region
    $region30: #{tpu_custom_call.1} parent=1 // pred_check
      _
    $region31: #{tpu_custom_call.1} parent=1 // pred_check_branch
      %1062 = sbr.rel (0) target = $region33
    $region32: #{tpu_custom_call.1} parent=1 // pred_region
      %1064 = vsyncadd [#allocation4], 0
      %s1065 = sshll.u32 [#allocation7], 4
      %s1066 = int_to_ptr.vmem [resolvable:$true] %s1065
      %s1067 = sshll.u32 %s3, 4
      %s1068 = int_to_ptr.hbm [resolvable:$true] %s1067
      %1073 = dma.vmem_to_hbm [thread:$0]  %s1066, 4096, %s1068, [#allocation4], 128, 128, 8
    $region33: #{tpu_custom_call.1} parent=1 // pred_fallthru
      _
    // Predicated region
    $region34: #{tpu_custom_call.1} parent=1 // pred_check
      _
    $region35: #{tpu_custom_call.1} parent=1 // pred_check_branch
      %1075 = sbr.rel (0) target = $region37
    $region36: #{tpu_custom_call.1} parent=1 // pred_region
      %1077 = dma.done [#allocation4], 4096
    $region37: #{tpu_custom_call.1} parent=1 // pred_fallthru
      _
    %1078 = vsyncpa [#allocation3], 1
    %1079 = vsyncpa [#allocation6], 1
    %1080 = vsyncpa [#allocation4], 1

</llo_original>
